<compile_context>
chip_gen: v7x
topology: tpu7x:2x2x1
jax: 0.10.0
libtpu: 0.0.40
codegen_flags: <defaults>
</compile_context>

<pallas_src>
import functools
import math

import jax
import jax.numpy as jnp
import numpy as np
from jax.experimental import pallas as pl
from jax.experimental.pallas import tpu as pltpu


# --------------------------- Hardware profile ---------------------------------
@functools.lru_cache(maxsize=None)
def _tpu_profile():
    """Returns (target_block_bytes, vmem_limit_bytes, small_vmem_chip)."""
    cap = None
    try:
        cap = getattr(pltpu.get_tpu_info(), "vmem_capacity_bytes", None)
    except Exception:  # interpret mode / emulator / unknown backend
        cap = None
    if cap is not None and cap <= 96 * 1024 * 1024:
        # v7x-like: 64 MiB VMEM per TensorCore; budget the f32 temporaries too.
        return 2 * 1024 * 1024, 32 * 1024 * 1024, True
    if cap is not None:
        # v5e / v6e: 128 MiB VMEM; this kernel is purely HBM-bound there.
        return 4 * 1024 * 1024, 64 * 1024 * 1024, False
    # Unknown: conservative settings that fit every generation.
    return 2 * 1024 * 1024, 32 * 1024 * 1024, False


# ----------------------------- Pallas kernels ---------------------------------
def _rope_kernel_mac(x_ref, cos_ref, sin_lo_ref, sin_hi_ref, o_ref, *, half):
    """out = x*cos + roll(x,-h)*sin_lo + roll(x,+h)*sin_hi  (3-table MAC form)."""
    x = x_ref[...].astype(jnp.float32)           # full-precision compute (as in PyTorch)
    c = x.shape[-1]
    # Lane rotations on the XLU (free relative to the VALU / ld-st slots):
    #   x_up[p] = x[(p + half) % c]  -> partner for lanes with d <  D/2
    #   x_dn[p] = x[(p - half) % c]  -> partner for lanes with d >= D/2
    # Wrap-around lanes only land on positions whose sin table entry is zero
    # (the lane tile is always a multiple of D), so a whole-block roll is exact.
    x_up = pltpu.roll(x, (-half) % c, 1)
    x_dn = pltpu.roll(x, half, 1)
    out = x * cos_ref[...] + x_up * sin_lo_ref[...] + x_dn * sin_hi_ref[...]
    o_ref[...] = out.astype(o_ref.dtype)


def _rope_kernel_select(x_ref, cos_ref, sin_ref, o_ref, *, half):
    """out = x*cos + where(d<D/2, roll(x,-h), roll(x,+h)) * sin_signed.

    2 mul + 1 add + 1 select and one fewer (1, C) table load than the MAC form;
    used on v7x where the kernel shifts from HBM-bound toward VALU/cast-bound.
    """
    x = x_ref[...].astype(jnp.float32)
    c = x.shape[-1]
    x_up = pltpu.roll(x, (-half) % c, 1)
    x_dn = pltpu.roll(x, half, 1)
    d = jax.lax.broadcasted_iota(jnp.int32, (1, c), 1)
    lo = (d % (2 * half)) < half                 # first half of each D-chunk
    x_swap = jnp.where(lo, x_up, x_dn)
    o_ref[...] = (x * cos_ref[...] + x_swap * sin_ref[...]).astype(o_ref.dtype)


# ------------------------------- Tiling ----------------------------------------
def _choose_tiles(n_rows, row_len, d, itemsize, target_block_bytes,
                  max_lane_elems=1 << 15):
    """Pick (row_tile R, lane_tile C) for a [n_rows, row_len] elementwise kernel.

    C is a multiple of both 128 (lane layout) and D (so the +-D/2 rolls only
    wrap into zero-table / unselected positions) and divides row_len; otherwise
    we fall back to the full row. R is the full row count or a multiple of 8
    (16 preferred), clamped so R*C*itemsize stays near target_block_bytes.
    """
    # --- lane (minor) tile ---
    unit = (d * 128) // math.gcd(d, 128)         # lcm(D, 128)
    if row_len <= max_lane_elems or row_len % unit != 0:
        lane_tile = row_len
    else:
        m = row_len // unit
        k_max = max(1, max_lane_elems // unit)
        k = 1
        for cand in range(min(k_max, m), 0, -1):
            if m % cand == 0:
                k = cand
                break
        lane_tile = unit * k

    # --- row (second-minor) tile ---
    max_rows = max(1, target_block_bytes // max(1, lane_tile * itemsize))
    if n_rows <= max_rows:
        row_tile = n_rows
    else:
        row_tile = (max_rows // 16) * 16
        if row_tile == 0:
            row_tile = (max_rows // 8) * 8
        if row_tile == 0:
            # A single 8-row block already exceeds the budget (huge, indivisible
            # rows). Accept one over-budget block rather than an illegal shape.
            # TODO(synk): split the lane axis with ragged tiles in this case.
            row_tile = min(8, n_rows)

    # Keep >=2 blocks along the (parallel) row axis whenever possible so both
    # v7x TensorCores get work; costs one extra ~0.35us step on single-TC chips.
    if row_tile >= n_rows and n_rows >= 32:
        row_tile = max(16, ((n_rows // 2) // 16) * 16)
    return row_tile, lane_tile


# ------------------------------- Wrapper ----------------------------------------
def _apply_rope_pallas(x, tables, *, compute_form="auto"):
    """x: [B, H, T, D]; tables: dict of [T, D] float32 tables. Same shape/dtype out."""
    B, H, T, D = x.shape
    half = D // 2
    target_block_bytes, vmem_limit, small_vmem = _tpu_profile()
    if compute_form == "auto":
        # HBM-bound on v5e/v6e -> keep the simple MAC form; v7x -> trim VALU work.
        compute_form = "select" if small_vmem else "mac"

    # Contiguous (free) reshape to a lane-dense 2D view. For decode / short
    # sequences (T*D < 256) fold the head axis into the lanes too so the
    # trailing dim stays >= 128 and stores are full-width, not masked vst.msk.
    if T * D < 256:
        N, L = B, H * T * D
        x_flat = x.reshape(N, L)
        prep = lambda t: jnp.tile(t.reshape(1, T * D), (1, H))
    else:
        N, L = B * H, T * D
        x_flat = x.reshape(N, L)
        prep = lambda t: t.reshape(1, T * D)

    R, C = _choose_tiles(N, L, D, x.dtype.itemsize, target_block_bytes)
    # Lane-tile axis OUTER, row-tile axis INNER: the (1, C) table blocks depend
    # only on the outer axis, so they stay VMEM-resident across all row tiles.
    grid = (pl.cdiv(L, C), pl.cdiv(N, R))

    x_spec = pl.BlockSpec((R, C), lambda c, r: (r, c))
    tab_spec = pl.BlockSpec((1, C), lambda c, r: (0, c))

    if compute_form == "mac":
        kernel = functools.partial(_rope_kernel_mac, half=half)
        operands = (x_flat, prep(tables["cos"]), prep(tables["sin_lo"]),
                    prep(tables["sin_hi"]))
        in_specs = [x_spec, tab_spec, tab_spec, tab_spec]
    elif compute_form == "select":
        kernel = functools.partial(_rope_kernel_select, half=half)
        operands = (x_flat, prep(tables["cos"]), prep(tables["sin_signed"]))
        in_specs = [x_spec, tab_spec, tab_spec]
    else:
        raise ValueError(f"unknown compute_form: {compute_form!r}")

    # TODO(synk): input_output_aliases={0: 0} would drop the second HBM buffer,
    # but is only safe when the caller donates x; left off to keep functional
    # semantics under eager execution.
    out_flat = pl.pallas_call(
        kernel,
        out_shape=jax.ShapeDtypeStruct((N, L), x.dtype),
        grid_spec=pltpu.PrefetchScalarGridSpec(
            num_scalar_prefetch=0,
            grid=grid,
            in_specs=in_specs,
            out_specs=pl.BlockSpec((R, C), lambda c, r: (r, c)),
        ),
        compiler_params=pltpu.CompilerParams(
            dimension_semantics=("parallel", "parallel"),
            vmem_limit_bytes=vmem_limit,
        ),
    )(*operands)
    return out_flat.reshape(B, H, T, D)


# ----------------------------- Module equivalent --------------------------------
class OpenELMRotaryEmbeddingPallas:
    """JAX/Pallas equivalent of OpenELMRotaryEmbedding.forward (fp32 RoPE)."""

    def __init__(self, model_dim: int, max_seq_length: int,
                 freq_constant: int = 10000, compute_form: str = "auto"):
        assert model_dim % 2 == 0
        self.model_dim = model_dim
        self.max_seq_length = max_seq_length
        self.freq_constant = freq_constant
        self.compute_form = compute_form
        # inv_freq = 1 / freq_constant ** (arange(0, D, 2) / D)
        self.inv_freq = 1.0 / (
            freq_constant ** (jnp.arange(0, model_dim, 2, dtype=jnp.float32) / model_dim))
        self._cached_seq_length = max_seq_length
        self._cached_tables = self._compute_tables(max_seq_length)

    def _compute_tables(self, seq_len: int):
        pos = jnp.arange(seq_len, dtype=jnp.float32)
        theta = jnp.einsum("i,j->ij", pos, self.inv_freq)        # [S, D/2]
        cos_h, sin_h = jnp.cos(theta), jnp.sin(theta)
        zeros = jnp.zeros_like(sin_h)
        return {
            # emb = concat([theta, theta]) => both cos halves are identical.
            "cos": jnp.concatenate([cos_h, cos_h], axis=-1),
            # Sign and half-mask folded into the sin tables (MAC form):
            "sin_lo": jnp.concatenate([-sin_h, zeros], axis=-1),  # pairs with x[p+D/2]
            "sin_hi": jnp.concatenate([zeros, sin_h], axis=-1),   # pairs with x[p-D/2]
            # Signed sin (select form): -sin on first half, +sin on second.
            "sin_signed": jnp.concatenate([-sin_h, sin_h], axis=-1),
        }

    def __call__(self, query, key):
        dim = key.shape[-1]
        key_len = key.shape[2]
        query_len = query.shape[2]
        assert dim == self.model_dim
        assert key.dtype == query.dtype
        assert key_len >= query_len, (
            "Number of keys has to be greater than or equal to number of queries.")
        # NOTE: host-side cache growth mirrors the PyTorch buffer recompute; it
        # relies on key_len being a static (trace-time) shape, which it is.
        if key_len > self._cached_seq_length:
            self._cached_seq_length = key_len
            self._cached_tables = self._compute_tables(key_len)

        q0 = key_len - query_len
        q_tabs = {k: v[q0:key_len] for k, v in self._cached_tables.items()}
        k_tabs = {k: v[:key_len] for k, v in self._cached_tables.items()}
        # TODO(synk): fusing the q and k launches (query_len == key_len case) would
        # save a few us of launch/pipeline overhead, but a naive concat adds an HBM
        # copy that costs more than it saves; kept as two launches.
        q_out = _apply_rope_pallas(query, q_tabs, compute_form=self.compute_form)
        k_out = _apply_rope_pallas(key, k_tabs, compute_form=self.compute_form)
        return q_out, k_out


# -------------------------------- Reference --------------------------------------
def _rope_ref(x, cos_td, sin_td):
    """Pure-JAX mirror of the PyTorch module (fp32 compute, rotate_half)."""
    xf = x.astype(jnp.float32)
    half = xf.shape[-1] // 2
    rot = jnp.concatenate([-xf[..., half:], xf[..., :half]], axis=-1)
    return (xf * cos_td[None, None] + rot * sin_td[None, None]).astype(x.dtype)


def _ref_tables(inv_freq, seq_len):
    pos = jnp.arange(seq_len, dtype=jnp.float32)
    theta = jnp.einsum("i,j->ij", pos, inv_freq)
    emb = jnp.concatenate([theta, theta], axis=-1)
    return jnp.cos(emb), jnp.sin(emb)


def _check(rope, query, key):
    key_len, query_len = key.shape[2], query.shape[2]
    q_out, k_out = rope(query, key)
    jax.block_until_ready((q_out, k_out))

    cos_t, sin_t = _ref_tables(rope.inv_freq, key_len)
    q_ref = _rope_ref(query, cos_t[key_len - query_len:key_len],
                      sin_t[key_len - query_len:key_len])
    k_ref = _rope_ref(key, cos_t[:key_len], sin_t[:key_len])

    np.testing.assert_allclose(np.asarray(q_out, np.float32),
                               np.asarray(q_ref, np.float32), atol=1e-2, rtol=1e-2)
    np.testing.assert_allclose(np.asarray(k_out, np.float32),
                               np.asarray(k_ref, np.float32), atol=1e-2, rtol=1e-2)
    assert q_out.shape == query.shape and q_out.dtype == query.dtype
    assert k_out.shape == key.shape and k_out.dtype == key.dtype


if __name__ == "__main__":
    rng = jax.random.PRNGKey(0)
    keys = jax.random.split(rng, 6)

    # --- Small prefill-style shapes (single block per launch). ---
    model_dim, max_seq_length = 32, 16
    B, Hq, Hk = 2, 4, 2
    query_len, key_len = 8, 16
    query = jax.random.normal(keys[0], (B, Hq, query_len, model_dim), dtype=jnp.bfloat16)
    key = jax.random.normal(keys[1], (B, Hk, key_len, model_dim), dtype=jnp.bfloat16)
    for form in ("mac", "select", "auto"):
        _check(OpenELMRotaryEmbeddingPallas(model_dim, max_seq_length,
                                            compute_form=form), query, key)

    # --- GQA-style shapes: row tiling (grid > 1), resident tables, megacore split. ---
    model_dim2, seq2 = 64, 128
    query2 = jax.random.normal(keys[2], (4, 32, seq2, model_dim2), dtype=jnp.bfloat16)
    key2 = jax.random.normal(keys[3], (4, 8, seq2, model_dim2), dtype=jnp.bfloat16)
    for form in ("mac", "select"):
        _check(OpenELMRotaryEmbeddingPallas(model_dim2, seq2, compute_form=form),
               query2, key2)

    # --- Decode-style shapes (T*D < 256): head axis folded into the lane dim. ---
    model_dim3 = 64
    query3 = jax.random.normal(keys[4], (2, 16, 1, model_dim3), dtype=jnp.bfloat16)
    key3 = jax.random.normal(keys[5], (2, 4, 1, model_dim3), dtype=jnp.bfloat16)
    for form in ("mac", "select"):
        _check(OpenELMRotaryEmbeddingPallas(model_dim3, 8, compute_form=form),
               query3, key3)

    print("KERNEL_OK")
</pallas_src>

<mosaic_0001>
module attributes {stable_mosaic.version = 11 : i64} {
  func.func @_rope_kernel_mac(%arg0: i32, %arg1: i32, %arg2: memref<8x256xbf16, #tpu.memory_space<vmem>>, %arg3: memref<1x256xf32, #tpu.memory_space<vmem>>, %arg4: memref<1x256xf32, #tpu.memory_space<vmem>>, %arg5: memref<1x256xf32, #tpu.memory_space<vmem>>, %arg6: memref<8x256xbf16, #tpu.memory_space<vmem>>) attributes {dimension_semantics = [#tpu.dimension_semantics<parallel>, #tpu.dimension_semantics<parallel>], iteration_bounds = array<i64: 1, 1>, scalar_prefetch = 0 : i64, scratch_operands = 0 : i64, tpu.core_type = #tpu.core_type<tc>, window_params = [{transform_indices = @transform_0, window_bounds = array<i64: 8, 256>}, {transform_indices = @transform_1, window_bounds = array<i64: 1, 256>}, {transform_indices = @transform_2, window_bounds = array<i64: 1, 256>}, {transform_indices = @transform_3, window_bounds = array<i64: 1, 256>}, {transform_indices = @transform_4, window_bounds = array<i64: 8, 256>}]} {
    %c0 = arith.constant 0 : index
    %c0_0 = arith.constant 0 : index
    %0 = vector.load %arg2[%c0, %c0_0] : memref<8x256xbf16, #tpu.memory_space<vmem>>, vector<8x256xbf16>
    %1 = arith.extf %0 : vector<8x256xbf16> to vector<8x256xf32>
    %c240_i32 = arith.constant 240 : i32
    %2 = tpu.dynamic_rotate %1 by %c240_i32 dim 1 : vector<8x256xf32>, i32 -> vector<8x256xf32>
    %c16_i32 = arith.constant 16 : i32
    %3 = tpu.dynamic_rotate %1 by %c16_i32 dim 1 : vector<8x256xf32>, i32 -> vector<8x256xf32>
    %c0_1 = arith.constant 0 : index
    %c0_2 = arith.constant 0 : index
    %4 = vector.load %arg3[%c0_1, %c0_2] : memref<1x256xf32, #tpu.memory_space<vmem>>, vector<1x256xf32>
    %5 = vector.broadcast %4 : vector<1x256xf32> to vector<8x256xf32>
    %6 = arith.mulf %1, %5 : vector<8x256xf32>
    %c0_3 = arith.constant 0 : index
    %c0_4 = arith.constant 0 : index
    %7 = vector.load %arg4[%c0_3, %c0_4] : memref<1x256xf32, #tpu.memory_space<vmem>>, vector<1x256xf32>
    %8 = vector.broadcast %7 : vector<1x256xf32> to vector<8x256xf32>
    %9 = arith.mulf %2, %8 : vector<8x256xf32>
    %10 = arith.addf %6, %9 : vector<8x256xf32>
    %c0_5 = arith.constant 0 : index
    %c0_6 = arith.constant 0 : index
    %11 = vector.load %arg5[%c0_5, %c0_6] : memref<1x256xf32, #tpu.memory_space<vmem>>, vector<1x256xf32>
    %12 = vector.broadcast %11 : vector<1x256xf32> to vector<8x256xf32>
    %13 = arith.mulf %3, %12 : vector<8x256xf32>
    %14 = arith.addf %10, %13 : vector<8x256xf32>
    %15 = arith.truncf %14 : vector<8x256xf32> to vector<8x256xbf16>
    %c0_7 = arith.constant 0 : index
    %c0_8 = arith.constant 0 : index
    %16 = vector.load %arg6[%c0_7, %c0_8] : memref<8x256xbf16, #tpu.memory_space<vmem>>, vector<8x256xbf16>
    tpu.vector_store %arg6[%c0_7, %c0_8], %15 {strides = array<i32>} : memref<8x256xbf16, #tpu.memory_space<vmem>>, vector<8x256xbf16>,
    return
  }
  func.func @transform_0(%arg0: i32, %arg1: i32) -> (i32, i32) {
    %c0_i32 = arith.constant 0 : i32
    return %arg1, %arg0 : i32, i32
  }
  func.func @transform_1(%arg0: i32, %arg1: i32) -> (i32, i32) {
    %c0_i32 = arith.constant 0 : i32
    %c0_i32_0 = arith.constant 0 : i32
    return %c0_i32, %arg0 : i32, i32
  }
  func.func @transform_2(%arg0: i32, %arg1: i32) -> (i32, i32) {
    %c0_i32 = arith.constant 0 : i32
    %c0_i32_0 = arith.constant 0 : i32
    return %c0_i32, %arg0 : i32, i32
  }
  func.func @transform_3(%arg0: i32, %arg1: i32) -> (i32, i32) {
    %c0_i32 = arith.constant 0 : i32
    %c0_i32_0 = arith.constant 0 : i32
    return %c0_i32, %arg0 : i32, i32
  }
  func.func @transform_4(%arg0: i32, %arg1: i32) -> (i32, i32) {
    %c0_i32 = arith.constant 0 : i32
    return %arg1, %arg0 : i32, i32
  }
}

</mosaic_0001>

<llo_original>
// kernel: tpu_custom_call.1
$region0: #{tpu_custom_call.1}
  #allocation0 [shape = 'u32[]', space=smem, size = 0x4, offset = 0x4, fixed_abs, tag = 'smem constant byte address 0x4 - core index']
  #allocation1 [shape = 'u32[144,128]{1,0:T(1,128)}', space=vmem, size = 0x12000, scoped, tag = 'internal scratch']
  %s0 = inlined_call_operand.hbm [shape: bf16[8,256], index: 0, kind: input, shape index: {}]
  %s1 = inlined_call_operand.vmem [shape: f32[1,256], index: 1, kind: input, shape index: {}]
  %s2 = inlined_call_operand.vmem [shape: f32[1,256], index: 2, kind: input, shape index: {}]
  %s3 = inlined_call_operand.vmem [shape: f32[1,256], index: 3, kind: input, shape index: {}]
  %s4 = inlined_call_operand.hbm [shape: bf16[8,256], index: 4, kind: output, shape index: {}]
  %s5 = sld [smem:[#allocation0]]
  $region30: #{tpu_custom_call.1} parent=0
    _
  %s7 = ssub.s32 1, %s5
  %s8 = scalar_select 0, %s7, %s5
  $region1: #{tpu_custom_call.1} parent=0
    #allocation2 [shape = 'u8[4096]{0}', space=vmem, size = 0x1000, scoped, tag = 'input window, operand 0, single buffered']
    #allocation3 [shape = 's32[1]{0}', space=sflag, size = 0x4, scoped, tag = 'scoped memory for tpu_custom_call.1']
    #allocation4 [shape = 's32[1]{0}', space=sflag, size = 0x4, scoped, tag = 'scoped memory for tpu_custom_call.1']
    #allocation5 [shape = 'u8[4096]{0}', space=vmem, size = 0x1000, scoped, tag = 'output window, operand 0, single buffered']
    %9 = vsyncpa [#allocation3], 0
    %10 = vsyncpa [#allocation4], 0
    // Predicated region
    $region2: #{tpu_custom_call.1} parent=1 // pred_check
      _
    $region3: #{tpu_custom_call.1} parent=1 // pred_check_branch
      %12 = sbr.rel (0) target = $region5
    $region4: #{tpu_custom_call.1} parent=1 // pred_region
      %s14 = ssub.s32 128, 128
      %15 = vsyncadd [#allocation3], %s14
      %s17 = sshll.u32 [#allocation2], 4
      %s18 = int_to_ptr.vmem [resolvable:$true] %s17
      %20 = dma.hbm_to_vmem [thread:$0]  %s0, 128, %s18, [#allocation3]
    $region5: #{tpu_custom_call.1} parent=1 // pred_fallthru
      _
    // Predicated region
    $region6: #{tpu_custom_call.1} parent=1 // pred_check
      _
    $region7: #{tpu_custom_call.1} parent=1 // pred_check_branch
      %22 = sbr.rel (0) target = $region9
    $region8: #{tpu_custom_call.1} parent=1 // pred_region
      _
    $region9: #{tpu_custom_call.1} parent=1 // pred_fallthru
      _
    // Predicated region
    $region10: #{tpu_custom_call.1} parent=1 // pred_check
      _
    $region11: #{tpu_custom_call.1} parent=1 // pred_check_branch
      %24 = sbr.rel (0) target = $region13
    $region12: #{tpu_custom_call.1} parent=1 // pred_region
      _
    $region13: #{tpu_custom_call.1} parent=1 // pred_fallthru
      _
    // Predicated region
    $region14: #{tpu_custom_call.1} parent=1 // pred_check
      _
    $region15: #{tpu_custom_call.1} parent=1 // pred_check_branch
      %26 = sbr.rel (0) target = $region17
    $region16: #{tpu_custom_call.1} parent=1 // pred_region
      _
    $region17: #{tpu_custom_call.1} parent=1 // pred_fallthru
      _
    // Predicated region
    $region18: #{tpu_custom_call.1} parent=1 // pred_check
      _
    $region19: #{tpu_custom_call.1} parent=1 // pred_check_branch
      %28 = sbr.rel (0) target = $region21
    $region20: #{tpu_custom_call.1} parent=1 // pred_region
      %29 = dma.done [#allocation3], 128
    $region21: #{tpu_custom_call.1} parent=1 // pred_fallthru
      _
    %v30 = vld [vmem:[#allocation2] sm:$0xff]
    %v31 = vunpack.c.l.bf16 %v30
    %v32 = vunpack.c.h.bf16 %v30
    %33 = vrot.lane.b32.xlu0 %v31, 112
    %v34 = vpop.permute.xlu0 %33
    %35 = vrot.lane.b32.xlu0 %v32, 112
    %v36 = vpop.permute.xlu0 %35
    %v37 = vlaneseq
    %v38 = vand.u32 %v37, 127
    %vm39 = vcmp.lt.s32.totalorder %v38, 112
    %v40 = vsel %vm39, %v34, %v36
    %v41 = vsel %vm39, %v36, %v34
    %42 = vrot.lane.b32.xlu0 %v31, 16
    %v43 = vpop.permute.xlu0 %42
    %44 = vrot.lane.b32.xlu0 %v32, 16
    %v45 = vpop.permute.xlu0 %44
    %vm46 = vcmp.lt.s32.totalorder %v38, 16
    %v47 = vsel %vm46, %v43, %v45
    %v48 = vsel %vm46, %v45, %v43
    %v49 = vld [vmem:[%s1] sm:$0x3]
    %v51 = vlaneseq
    %v52 = vshrl.u32 %v51, 7
    %v53 = vsub.s32 0, %v52
    %v54 = vrot.slane %v49, %v53
    %v55 = vlaneseq
    %v56 = vshrl.u32 %v55, 7
    %v57 = vsub.s32 1, %v56
    %v58 = vrot.slane %v49, %v57
    %v61 = vmul.f32 %v31, %v54
    %v62 = vmul.f32 %v32, %v58
    %v63 = vld [vmem:[%s2] sm:$0x3]
    %v65 = vlaneseq
    %v66 = vshrl.u32 %v65, 7
    %v67 = vsub.s32 0, %v66
    %v68 = vrot.slane %v63, %v67
    %v69 = vlaneseq
    %v70 = vshrl.u32 %v69, 7
    %v71 = vsub.s32 1, %v70
    %v72 = vrot.slane %v63, %v71
    %v75 = vmul.f32 %v40, %v68
    %v76 = vmul.f32 %v41, %v72
    %v77 = vadd.f32 %v61, %v75
    %v78 = vadd.f32 %v62, %v76
    %v79 = vld [vmem:[%s3] sm:$0x3]
    %v81 = vlaneseq
    %v82 = vshrl.u32 %v81, 7
    %v83 = vsub.s32 0, %v82
    %v84 = vrot.slane %v79, %v83
    %v85 = vlaneseq
    %v86 = vshrl.u32 %v85, 7
    %v87 = vsub.s32 1, %v86
    %v88 = vrot.slane %v79, %v87
    %v91 = vmul.f32 %v48, %v84
    %v92 = vmul.f32 %v47, %v88
    %v93 = vadd.f32 %v77, %v91
    %v94 = vadd.f32 %v78, %v92
    %v95 = vpack.c.bf16 %v93, %v93
    %v96 = vpack.c.bf16 %v94, %v94
    %v99 = vunpack.c.l.b16 %v95
    %v100 = vunpack.c.l.b16 %v96
    %v101 = vpack.c.b16 %v100, %v99
    %103 = vst [vmem:[#allocation5] sm:$0xff] %v101
    // Predicated region
    $region22: #{tpu_custom_call.1} parent=1 // pred_check
      _
    $region23: #{tpu_custom_call.1} parent=1 // pred_check_branch
      %105 = sbr.rel (0) target = $region25
    $region24: #{tpu_custom_call.1} parent=1 // pred_region
      %s107 = ssub.s32 128, 128
      %108 = vsyncadd [#allocation4], %s107
      %s110 = sshll.u32 [#allocation5], 4
      %s111 = int_to_ptr.vmem [resolvable:$true] %s110
      %113 = dma.vmem_to_hbm [thread:$0]  %s111, 128, %s4, [#allocation4]
    $region25: #{tpu_custom_call.1} parent=1 // pred_fallthru
      _
    // Predicated region
    $region26: #{tpu_custom_call.1} parent=1 // pred_check
      _
    $region27: #{tpu_custom_call.1} parent=1 // pred_check_branch
      %115 = sbr.rel (0) target = $region29
    $region28: #{tpu_custom_call.1} parent=1 // pred_region
      %116 = dma.done [#allocation4], 128
    $region29: #{tpu_custom_call.1} parent=1 // pred_fallthru
      _
    %117 = vsyncpa [#allocation3], 1
    %118 = vsyncpa [#allocation4], 1

</llo_original>
